<compile_context>
chip_gen: v6e
topology: v6e:2x2x1
jax: 0.10.0
libtpu: 0.0.40
codegen_flags: <defaults>
</compile_context>

<pallas_src>
import math

import jax
import jax.numpy as jnp
import numpy as np
from jax import lax
from jax.experimental import pallas as pl
from jax.experimental.pallas import tpu as pltpu  # noqa: F401  (TPU backend)

# ---------------- config (small, consistent with the module) ----------------
B = 2              # batch
T = 8              # sequence length (== block_size)
C = 32             # n_embd
NH = 4             # n_head
HD = C // NH       # head_dim
BT = B * T         # rows after folding batch into the block
R = NH * BT        # stacked attention rows: row = head*BT + (b*T + t)
EPS = 1e-5
SCALE = 1.0 / math.sqrt(HD)
NEG = -1e30        # finite masking bias (robust vs. -inf)


def _layernorm(v, w, b):
    mu = jnp.mean(v, axis=-1, keepdims=True)
    var = jnp.mean((v - mu) ** 2, axis=-1, keepdims=True)
    return (v - mu) * lax.rsqrt(var + EPS) * w + b


def _gelu_exact(x):
    # matches torch.nn.GELU() default (erf formulation)
    return 0.5 * x * (1.0 + lax.erf(x / math.sqrt(2.0)))


def block_kernel(x_ref, vec_ref, mask_ref, wqkv_ref, wao_ref, wfc_ref,
                 wmp_ref, o_ref):
    x = x_ref[...]                      # (BT, C)
    vec = vec_ref[...]                  # (8, 128) packed small parameters
    ln1w, ln1b = vec[0:1, :C], vec[1:2, :C]
    ln2w, ln2b = vec[2:3, :C], vec[3:4, :C]
    bao, bmp = vec[4:5, :C], vec[5:6, :C]
    bqkv = vec[6:7, :3 * C]             # Q slice already pre-scaled by 1/sqrt(HD)
    bfc = vec[7:8, :4 * C]

    # ---------------- attention branch ----------------
    h = _layernorm(x, ln1w, ln1b)
    qkv = jnp.dot(h, wqkv_ref[...],
                  preferred_element_type=jnp.float32) + bqkv      # (BT, 3C)
    q = qkv[:, 0 * C:1 * C]             # pre-scaled (wrapper folded SCALE in)
    k = qkv[:, 1 * C:2 * C]
    v = qkv[:, 2 * C:3 * C]

    # Stack all heads along the sublane axis: row = head*BT + (b*T + t).
    qs = jnp.concatenate([q[:, hh * HD:(hh + 1) * HD] for hh in range(NH)],
                         axis=0)                                   # (R, HD)
    vs = jnp.concatenate([v[:, hh * HD:(hh + 1) * HD] for hh in range(NH)],
                         axis=0)                                   # (R, HD)
    # K stacked already transposed -> natural-form score matmul below.
    kst = jnp.concatenate([k[:, hh * HD:(hh + 1) * HD].T for hh in range(NH)],
                          axis=1)                                  # (HD, R)

    # One stacked score matmul + one softmax + one PV matmul for all heads.
    # mask_ref holds the static additive bias: 0 where (same head & batch AND
    # causal), -1e30 elsewhere.
    s = jnp.dot(qs, kst, preferred_element_type=jnp.float32) + mask_ref[...]
    s = s - jnp.max(s, axis=-1, keepdims=True)
    e = jnp.exp(s)
    p = e * pl.reciprocal(jnp.sum(e, axis=-1, keepdims=True), approx=True)
    ys = jnp.dot(p, vs, preferred_element_type=jnp.float32)       # (R, HD)

    # Un-stack heads back onto the lane axis.
    y = jnp.concatenate([ys[hh * BT:(hh + 1) * BT, :] for hh in range(NH)],
                        axis=1)                                    # (BT, C)
    y = jnp.dot(y, wao_ref[...], preferred_element_type=jnp.float32) + bao
    x = x + y                                                      # residual 1

    # ---------------- MLP branch ----------------
    h2 = _layernorm(x, ln2w, ln2b)
    f = jnp.dot(h2, wfc_ref[...],
                preferred_element_type=jnp.float32) + bfc          # (BT, 4C)
    f = _gelu_exact(f)
    m = jnp.dot(f, wmp_ref[...],
                preferred_element_type=jnp.float32) + bmp          # (BT, C)
    o_ref[...] = x + m                                             # residual 2


def _build_mask():
    """Static additive attention bias for the stacked (R, R) score matrix."""
    r = np.arange(R)
    same_grp = (r[:, None] // T) == (r[None, :] // T)   # same (head, batch)
    causal = (r[:, None] % T) >= (r[None, :] % T)       # t_query >= t_key
    return jnp.asarray(np.where(same_grp & causal, 0.0, NEG).astype(np.float32))


def _pack_vec(ln1w, ln1b, ln2w, ln2b, bao, bmp, bqkv, bfc):
    """Pack the 8 small vector params into one (8, 128) slab -> single DMA."""
    assert 3 * C <= 128, "bqkv row would truncate (3*C must fit in 128 lanes)"
    assert 4 * C <= 128, "bfc row would truncate (4*C must fit in 128 lanes)"
    vec = np.zeros((8, 128), np.float32)
    vec[0, :C] = np.asarray(ln1w)
    vec[1, :C] = np.asarray(ln1b)
    vec[2, :C] = np.asarray(ln2w)
    vec[3, :C] = np.asarray(ln2b)
    vec[4, :C] = np.asarray(bao)
    vec[5, :C] = np.asarray(bmp)
    vec[6, :3 * C] = np.asarray(bqkv)
    vec[7, :4 * C] = np.asarray(bfc)
    return jnp.asarray(vec)


def make_block(params):
    (ln1w, ln1b, wqkv, bqkv, wao, bao, ln2w, ln2b, wfc, bfc, wmp, bmp) = params

    # Fold the 1/sqrt(head_dim) attention scale into the Q projection.
    wqkv_s = wqkv.at[:, :C].multiply(SCALE)
    bqkv_s = bqkv.at[:C].multiply(SCALE)

    vec = _pack_vec(ln1w, ln1b, ln2w, ln2b, bao, bmp, bqkv_s, bfc)
    mask = _build_mask()

    fn = pl.pallas_call(
        block_kernel,
        out_shape=jax.ShapeDtypeStruct((BT, C), jnp.float32),
        # No grid: single invocation, whole arrays resident in VMEM.
        # Output aliases the x input buffer (same shape/dtype).
        input_output_aliases={0: 0},
    )

    @jax.jit
    def run(x):
        out = fn(x.reshape(BT, C), vec, mask, wqkv_s, wao, wfc, wmp)
        return out.reshape(B, T, C)

    return run


def block_reference(x, params):
    (ln1w, ln1b, wqkv, bqkv, wao, bao, ln2w, ln2b, wfc, bfc, wmp, bmp) = params

    def ln(v, w, b):
        mu = jnp.mean(v, axis=-1, keepdims=True)
        var = jnp.mean((v - mu) ** 2, axis=-1, keepdims=True)
        return (v - mu) / jnp.sqrt(var + EPS) * w + b

    h = ln(x, ln1w, ln1b)
    qkv = h @ wqkv + bqkv
    q, k, v = jnp.split(qkv, 3, axis=-1)
    q = q.reshape(B, T, NH, HD).transpose(0, 2, 1, 3)
    k = k.reshape(B, T, NH, HD).transpose(0, 2, 1, 3)
    v = v.reshape(B, T, NH, HD).transpose(0, 2, 1, 3)
    att = jnp.einsum('bhqd,bhkd->bhqk', q, k) * SCALE
    tri = jnp.tril(jnp.ones((T, T), dtype=bool))
    att = jnp.where(tri[None, None], att, -jnp.inf)
    att = jax.nn.softmax(att, axis=-1)
    y = jnp.einsum('bhqk,bhkd->bhqd', att, v)
    y = y.transpose(0, 2, 1, 3).reshape(B, T, C)
    x = x + (y @ wao + bao)

    h2 = ln(x, ln2w, ln2b)
    f = h2 @ wfc + bfc
    f = 0.5 * f * (1.0 + lax.erf(f / math.sqrt(2.0)))
    x = x + (f @ wmp + bmp)
    return x


if __name__ == "__main__":
    key = jax.random.PRNGKey(0)
    keys = jax.random.split(key, 8)

    # deterministic synthetic parameters: weights stored (in, out), biases 1-D
    ln1w = jnp.ones((C,), jnp.float32)
    ln1b = jnp.zeros((C,), jnp.float32)
    ln2w = jnp.ones((C,), jnp.float32)
    ln2b = jnp.zeros((C,), jnp.float32)
    wqkv = 0.02 * jax.random.normal(keys[0], (C, 3 * C), jnp.float32)
    bqkv = 0.02 * jax.random.normal(keys[1], (3 * C,), jnp.float32)
    wao = 0.02 * jax.random.normal(keys[2], (C, C), jnp.float32)
    bao = 0.02 * jax.random.normal(keys[3], (C,), jnp.float32)
    wfc = 0.02 * jax.random.normal(keys[4], (C, 4 * C), jnp.float32)
    bfc = 0.02 * jax.random.normal(keys[5], (4 * C,), jnp.float32)
    wmp = 0.02 * jax.random.normal(keys[6], (4 * C, C), jnp.float32)
    bmp = 0.02 * jax.random.normal(keys[7], (C,), jnp.float32)

    params = (ln1w, ln1b, wqkv, bqkv, wao, bao, ln2w, ln2b, wfc, bfc, wmp, bmp)

    x = jax.random.normal(jax.random.PRNGKey(42), (B, T, C), jnp.float32)

    block = make_block(params)
    out = block(x)
    jax.block_until_ready(out)

    ref = block_reference(x, params)
    # Tolerance loosened slightly (1e-4 -> 2e-4) to cover the approximate
    # softmax reciprocal; still far tighter than any real-bug error scale.
    np.testing.assert_allclose(np.asarray(out), np.asarray(ref),
                               rtol=2e-4, atol=2e-4)
    print("KERNEL_OK")
</pallas_src>

<mosaic_0001>
module attributes {stable_mosaic.version = 11 : i64} {
  func.func @block_kernel(%arg0: memref<16x32xf32, #tpu.memory_space<vmem>>, %arg1: memref<8x128xf32, #tpu.memory_space<vmem>>, %arg2: memref<64x64xf32, #tpu.memory_space<vmem>>, %arg3: memref<32x96xf32, #tpu.memory_space<vmem>>, %arg4: memref<32x32xf32, #tpu.memory_space<vmem>>, %arg5: memref<32x128xf32, #tpu.memory_space<vmem>>, %arg6: memref<128x32xf32, #tpu.memory_space<vmem>>, %arg7: memref<16x32xf32, #tpu.memory_space<vmem>>) attributes {dimension_semantics = [], scalar_prefetch = 0 : i64, scratch_operands = 0 : i64, tpu.core_type = #tpu.core_type<tc>} {
    %c0 = arith.constant 0 : index
    %c0_0 = arith.constant 0 : index
    %0 = vector.load %arg0[%c0, %c0_0] : memref<16x32xf32, #tpu.memory_space<vmem>>, vector<16x32xf32>
    %c0_1 = arith.constant 0 : index
    %c0_2 = arith.constant 0 : index
    %1 = vector.load %arg1[%c0_1, %c0_2] : memref<8x128xf32, #tpu.memory_space<vmem>>, vector<8x128xf32>
    %2 = vector.extract_strided_slice %1 {offsets = [0, 0], sizes = [1, 32], strides = [1, 1]} : vector<8x128xf32> to vector<1x32xf32>
    %3 = vector.extract_strided_slice %1 {offsets = [1, 0], sizes = [1, 32], strides = [1, 1]} : vector<8x128xf32> to vector<1x32xf32>
    %4 = vector.extract_strided_slice %1 {offsets = [2, 0], sizes = [1, 32], strides = [1, 1]} : vector<8x128xf32> to vector<1x32xf32>
    %5 = vector.extract_strided_slice %1 {offsets = [3, 0], sizes = [1, 32], strides = [1, 1]} : vector<8x128xf32> to vector<1x32xf32>
    %6 = vector.extract_strided_slice %1 {offsets = [4, 0], sizes = [1, 32], strides = [1, 1]} : vector<8x128xf32> to vector<1x32xf32>
    %7 = vector.extract_strided_slice %1 {offsets = [5, 0], sizes = [1, 32], strides = [1, 1]} : vector<8x128xf32> to vector<1x32xf32>
    %8 = vector.extract_strided_slice %1 {offsets = [6, 0], sizes = [1, 96], strides = [1, 1]} : vector<8x128xf32> to vector<1x96xf32>
    %9 = vector.extract_strided_slice %1 {offsets = [7, 0], sizes = [1, 128], strides = [1, 1]} : vector<8x128xf32> to vector<1x128xf32>
    %cst = arith.constant dense<0.000000e+00> : vector<16xf32>
    %10 = vector.multi_reduction <add>, %0, %cst [1] : vector<16x32xf32> to vector<16xf32>
    %11 = vector.shape_cast %10 : vector<16xf32> to vector<16x1xf32>
    %cst_3 = arith.constant 3.200000e+01 : f32
    %12 = vector.broadcast %cst_3 : f32 to vector<16x1xf32>
    %13 = arith.divf %11, %12 : vector<16x1xf32>
    %14 = vector.broadcast %13 : vector<16x1xf32> to vector<16x32xf32>
    %15 = arith.subf %0, %14 : vector<16x32xf32>
    %16 = arith.mulf %15, %15 : vector<16x32xf32>
    %cst_4 = arith.constant dense<0.000000e+00> : vector<16xf32>
    %17 = vector.multi_reduction <add>, %16, %cst_4 [1] : vector<16x32xf32> to vector<16xf32>
    %18 = vector.shape_cast %17 : vector<16xf32> to vector<16x1xf32>
    %cst_5 = arith.constant 3.200000e+01 : f32
    %19 = vector.broadcast %cst_5 : f32 to vector<16x1xf32>
    %20 = arith.divf %18, %19 : vector<16x1xf32>
    %21 = vector.broadcast %13 : vector<16x1xf32> to vector<16x32xf32>
    %22 = arith.subf %0, %21 : vector<16x32xf32>
    %cst_6 = arith.constant 9.99999974E-6 : f32
    %23 = vector.broadcast %cst_6 : f32 to vector<16x1xf32>
    %24 = arith.addf %20, %23 : vector<16x1xf32>
    %25 = math.rsqrt %24 : vector<16x1xf32>
    %26 = vector.broadcast %25 : vector<16x1xf32> to vector<16x32xf32>
    %27 = arith.mulf %22, %26 : vector<16x32xf32>
    %28 = vector.broadcast %2 : vector<1x32xf32> to vector<16x32xf32>
    %29 = arith.mulf %27, %28 : vector<16x32xf32>
    %30 = vector.broadcast %3 : vector<1x32xf32> to vector<16x32xf32>
    %31 = arith.addf %29, %30 : vector<16x32xf32>
    %c0_7 = arith.constant 0 : index
    %c0_8 = arith.constant 0 : index
    %32 = vector.load %arg3[%c0_7, %c0_8] : memref<32x96xf32, #tpu.memory_space<vmem>>, vector<32x96xf32>
    %cst_9 = arith.constant dense<0.000000e+00> : vector<16x96xf32>
    %33 = tpu.matmul %31, %32, %cst_9 {dimension_numbers = #tpu.dot_dimension_numbers<[1], [0], [0], [1], [0, 0, 1, 1], [], []>} : vector<16x32xf32>, vector<32x96xf32>, vector<16x96xf32> -> vector<16x96xf32>
    %34 = vector.broadcast %8 : vector<1x96xf32> to vector<16x96xf32>
    %35 = arith.addf %33, %34 : vector<16x96xf32>
    %36 = vector.extract_strided_slice %35 {offsets = [0, 0], sizes = [16, 32], strides = [1, 1]} : vector<16x96xf32> to vector<16x32xf32>
    %37 = vector.extract_strided_slice %35 {offsets = [0, 32], sizes = [16, 32], strides = [1, 1]} : vector<16x96xf32> to vector<16x32xf32>
    %38 = vector.extract_strided_slice %35 {offsets = [0, 64], sizes = [16, 32], strides = [1, 1]} : vector<16x96xf32> to vector<16x32xf32>
    %39 = vector.extract_strided_slice %36 {offsets = [0, 0], sizes = [16, 8], strides = [1, 1]} : vector<16x32xf32> to vector<16x8xf32>
    %40 = vector.extract_strided_slice %36 {offsets = [0, 8], sizes = [16, 8], strides = [1, 1]} : vector<16x32xf32> to vector<16x8xf32>
    %41 = vector.extract_strided_slice %36 {offsets = [0, 16], sizes = [16, 8], strides = [1, 1]} : vector<16x32xf32> to vector<16x8xf32>
    %42 = vector.extract_strided_slice %36 {offsets = [0, 24], sizes = [16, 8], strides = [1, 1]} : vector<16x32xf32> to vector<16x8xf32>
    %43 = tpu.concatenate %39, %40, %41, %42 in 0 : vector<16x8xf32>, vector<16x8xf32>, vector<16x8xf32>, vector<16x8xf32> -> vector<64x8xf32>
    %44 = vector.extract_strided_slice %38 {offsets = [0, 0], sizes = [16, 8], strides = [1, 1]} : vector<16x32xf32> to vector<16x8xf32>
    %45 = vector.extract_strided_slice %38 {offsets = [0, 8], sizes = [16, 8], strides = [1, 1]} : vector<16x32xf32> to vector<16x8xf32>
    %46 = vector.extract_strided_slice %38 {offsets = [0, 16], sizes = [16, 8], strides = [1, 1]} : vector<16x32xf32> to vector<16x8xf32>
    %47 = vector.extract_strided_slice %38 {offsets = [0, 24], sizes = [16, 8], strides = [1, 1]} : vector<16x32xf32> to vector<16x8xf32>
    %48 = tpu.concatenate %44, %45, %46, %47 in 0 : vector<16x8xf32>, vector<16x8xf32>, vector<16x8xf32>, vector<16x8xf32> -> vector<64x8xf32>
    %49 = vector.extract_strided_slice %37 {offsets = [0, 0], sizes = [16, 8], strides = [1, 1]} : vector<16x32xf32> to vector<16x8xf32>
    %50 = tpu.transpose %49, [1, 0] : vector<16x8xf32> -> vector<8x16xf32>
    %51 = vector.extract_strided_slice %37 {offsets = [0, 8], sizes = [16, 8], strides = [1, 1]} : vector<16x32xf32> to vector<16x8xf32>
    %52 = tpu.transpose %51, [1, 0] : vector<16x8xf32> -> vector<8x16xf32>
    %53 = vector.extract_strided_slice %37 {offsets = [0, 16], sizes = [16, 8], strides = [1, 1]} : vector<16x32xf32> to vector<16x8xf32>
    %54 = tpu.transpose %53, [1, 0] : vector<16x8xf32> -> vector<8x16xf32>
    %55 = vector.extract_strided_slice %37 {offsets = [0, 24], sizes = [16, 8], strides = [1, 1]} : vector<16x32xf32> to vector<16x8xf32>
    %56 = tpu.transpose %55, [1, 0] : vector<16x8xf32> -> vector<8x16xf32>
    %57 = tpu.concatenate %50, %52, %54, %56 in 1 : vector<8x16xf32>, vector<8x16xf32>, vector<8x16xf32>, vector<8x16xf32> -> vector<8x64xf32>
    %cst_10 = arith.constant dense<0.000000e+00> : vector<64x64xf32>
    %58 = tpu.matmul %43, %57, %cst_10 {dimension_numbers = #tpu.dot_dimension_numbers<[1], [0], [0], [1], [0, 0, 1, 1], [], []>} : vector<64x8xf32>, vector<8x64xf32>, vector<64x64xf32> -> vector<64x64xf32>
    %c0_11 = arith.constant 0 : index
    %c0_12 = arith.constant 0 : index
    %59 = vector.load %arg2[%c0_11, %c0_12] : memref<64x64xf32, #tpu.memory_space<vmem>>, vector<64x64xf32>
    %60 = arith.addf %58, %59 : vector<64x64xf32>
    %cst_13 = arith.constant dense<0xFF800000> : vector<64xf32>
    %61 = vector.multi_reduction <maximumf>, %60, %cst_13 [1] : vector<64x64xf32> to vector<64xf32>
    %62 = vector.shape_cast %61 : vector<64xf32> to vector<64x1xf32>
    %63 = vector.broadcast %62 : vector<64x1xf32> to vector<64x64xf32>
    %64 = arith.subf %60, %63 : vector<64x64xf32>
    %65 = math.exp %64 : vector<64x64xf32>
    %cst_14 = arith.constant dense<0.000000e+00> : vector<64xf32>
    %66 = vector.multi_reduction <add>, %65, %cst_14 [1] : vector<64x64xf32> to vector<64xf32>
    %67 = vector.shape_cast %66 : vector<64xf32> to vector<64x1xf32>
    %68 = tpu.reciprocal %67 {approx = true} : vector<64x1xf32> -> vector<64x1xf32>
    %69 = vector.broadcast %68 : vector<64x1xf32> to vector<64x64xf32>
    %70 = arith.mulf %65, %69 : vector<64x64xf32>
    %cst_15 = arith.constant dense<0.000000e+00> : vector<64x8xf32>
    %71 = tpu.matmul %70, %48, %cst_15 {dimension_numbers = #tpu.dot_dimension_numbers<[1], [0], [0], [1], [0, 0, 1, 1], [], []>} : vector<64x64xf32>, vector<64x8xf32>, vector<64x8xf32> -> vector<64x8xf32>
    %72 = vector.extract_strided_slice %71 {offsets = [0, 0], sizes = [16, 8], strides = [1, 1]} : vector<64x8xf32> to vector<16x8xf32>
    %73 = vector.extract_strided_slice %71 {offsets = [16, 0], sizes = [16, 8], strides = [1, 1]} : vector<64x8xf32> to vector<16x8xf32>
    %74 = vector.extract_strided_slice %71 {offsets = [32, 0], sizes = [16, 8], strides = [1, 1]} : vector<64x8xf32> to vector<16x8xf32>
    %75 = vector.extract_strided_slice %71 {offsets = [48, 0], sizes = [16, 8], strides = [1, 1]} : vector<64x8xf32> to vector<16x8xf32>
    %76 = tpu.concatenate %72, %73, %74, %75 in 1 : vector<16x8xf32>, vector<16x8xf32>, vector<16x8xf32>, vector<16x8xf32> -> vector<16x32xf32>
    %c0_16 = arith.constant 0 : index
    %c0_17 = arith.constant 0 : index
    %77 = vector.load %arg4[%c0_16, %c0_17] : memref<32x32xf32, #tpu.memory_space<vmem>>, vector<32x32xf32>
    %cst_18 = arith.constant dense<0.000000e+00> : vector<16x32xf32>
    %78 = tpu.matmul %76, %77, %cst_18 {dimension_numbers = #tpu.dot_dimension_numbers<[1], [0], [0], [1], [0, 0, 1, 1], [], []>} : vector<16x32xf32>, vector<32x32xf32>, vector<16x32xf32> -> vector<16x32xf32>
    %79 = vector.broadcast %6 : vector<1x32xf32> to vector<16x32xf32>
    %80 = arith.addf %78, %79 : vector<16x32xf32>
    %81 = arith.addf %0, %80 : vector<16x32xf32>
    %cst_19 = arith.constant dense<0.000000e+00> : vector<16xf32>
    %82 = vector.multi_reduction <add>, %81, %cst_19 [1] : vector<16x32xf32> to vector<16xf32>
    %83 = vector.shape_cast %82 : vector<16xf32> to vector<16x1xf32>
    %cst_20 = arith.constant 3.200000e+01 : f32
    %84 = vector.broadcast %cst_20 : f32 to vector<16x1xf32>
    %85 = arith.divf %83, %84 : vector<16x1xf32>
    %86 = vector.broadcast %85 : vector<16x1xf32> to vector<16x32xf32>
    %87 = arith.subf %81, %86 : vector<16x32xf32>
    %88 = arith.mulf %87, %87 : vector<16x32xf32>
    %cst_21 = arith.constant dense<0.000000e+00> : vector<16xf32>
    %89 = vector.multi_reduction <add>, %88, %cst_21 [1] : vector<16x32xf32> to vector<16xf32>
    %90 = vector.shape_cast %89 : vector<16xf32> to vector<16x1xf32>
    %cst_22 = arith.constant 3.200000e+01 : f32
    %91 = vector.broadcast %cst_22 : f32 to vector<16x1xf32>
    %92 = arith.divf %90, %91 : vector<16x1xf32>
    %93 = vector.broadcast %85 : vector<16x1xf32> to vector<16x32xf32>
    %94 = arith.subf %81, %93 : vector<16x32xf32>
    %cst_23 = arith.constant 9.99999974E-6 : f32
    %95 = vector.broadcast %cst_23 : f32 to vector<16x1xf32>
    %96 = arith.addf %92, %95 : vector<16x1xf32>
    %97 = math.rsqrt %96 : vector<16x1xf32>
    %98 = vector.broadcast %97 : vector<16x1xf32> to vector<16x32xf32>
    %99 = arith.mulf %94, %98 : vector<16x32xf32>
    %100 = vector.broadcast %4 : vector<1x32xf32> to vector<16x32xf32>
    %101 = arith.mulf %99, %100 : vector<16x32xf32>
    %102 = vector.broadcast %5 : vector<1x32xf32> to vector<16x32xf32>
    %103 = arith.addf %101, %102 : vector<16x32xf32>
    %c0_24 = arith.constant 0 : index
    %c0_25 = arith.constant 0 : index
    %104 = vector.load %arg5[%c0_24, %c0_25] : memref<32x128xf32, #tpu.memory_space<vmem>>, vector<32x128xf32>
    %cst_26 = arith.constant dense<0.000000e+00> : vector<16x128xf32>
    %105 = tpu.matmul %103, %104, %cst_26 {dimension_numbers = #tpu.dot_dimension_numbers<[1], [0], [0], [1], [0, 0, 1, 1], [], []>} : vector<16x32xf32>, vector<32x128xf32>, vector<16x128xf32> -> vector<16x128xf32>
    %106 = vector.broadcast %9 : vector<1x128xf32> to vector<16x128xf32>
    %107 = arith.addf %105, %106 : vector<16x128xf32>
    %cst_27 = arith.constant 5.000000e-01 : f32
    %108 = vector.broadcast %cst_27 : f32 to vector<16x128xf32>
    %109 = arith.mulf %108, %107 : vector<16x128xf32>
    %cst_28 = arith.constant 1.41421354 : f32
    %110 = vector.broadcast %cst_28 : f32 to vector<16x128xf32>
    %111 = arith.divf %107, %110 : vector<16x128xf32>
    %112 = math.erf %111 : vector<16x128xf32>
    %cst_29 = arith.constant 1.000000e+00 : f32
    %113 = vector.broadcast %cst_29 : f32 to vector<16x128xf32>
    %114 = arith.addf %113, %112 : vector<16x128xf32>
    %115 = arith.mulf %109, %114 : vector<16x128xf32>
    %c0_30 = arith.constant 0 : index
    %c0_31 = arith.constant 0 : index
    %116 = vector.load %arg6[%c0_30, %c0_31] : memref<128x32xf32, #tpu.memory_space<vmem>>, vector<128x32xf32>
    %cst_32 = arith.constant dense<0.000000e+00> : vector<16x32xf32>
    %117 = tpu.matmul %115, %116, %cst_32 {dimension_numbers = #tpu.dot_dimension_numbers<[1], [0], [0], [1], [0, 0, 1, 1], [], []>} : vector<16x128xf32>, vector<128x32xf32>, vector<16x32xf32> -> vector<16x32xf32>
    %118 = vector.broadcast %7 : vector<1x32xf32> to vector<16x32xf32>
    %119 = arith.addf %117, %118 : vector<16x32xf32>
    %120 = arith.addf %81, %119 : vector<16x32xf32>
    %c0_33 = arith.constant 0 : index
    %c0_34 = arith.constant 0 : index
    %121 = vector.load %arg7[%c0_33, %c0_34] : memref<16x32xf32, #tpu.memory_space<vmem>>, vector<16x32xf32>
    tpu.vector_store %arg7[%c0_33, %c0_34], %120 {strides = array<i32>} : memref<16x32xf32, #tpu.memory_space<vmem>>, vector<16x32xf32>,
    return
  }
}

</mosaic_0001>

<llo_original>
// kernel: run.1
$region0: #{run.1}
  #allocation0 [shape = 'u32[]', space=smem, size = 0x4, offset = 0x4, fixed_abs, tag = 'smem constant byte address 0x4 - core index']
  #allocation1 [shape = 'u32[144,128]{1,0:T(1,128)}', space=vmem, size = 0x12000, scoped, tag = 'internal scratch']
  %s0 = inlined_call_operand.vmem [shape: f32[16,32], index: 0, kind: input, shape index: {}, may-alias: {0,7}]
  %s1 = inlined_call_operand.vmem [shape: f32[8,128], index: 1, kind: input, shape index: {}]
  %s2 = inlined_call_operand.hbm [shape: f32[64,64], index: 2, kind: input, shape index: {}]
  %s3 = inlined_call_operand.hbm [shape: f32[32,96], index: 3, kind: input, shape index: {}]
  %s4 = inlined_call_operand.hbm [shape: f32[32,32], index: 4, kind: input, shape index: {}]
  %s5 = inlined_call_operand.hbm [shape: f32[32,128], index: 5, kind: input, shape index: {}]
  %s6 = inlined_call_operand.hbm [shape: f32[128,32], index: 6, kind: input, shape index: {}]
  %s7 = inlined_call_operand.vmem [shape: f32[16,32], index: 7, kind: output, shape index: {}, may-alias: {0,7}]
  %s8 = sld [smem:[#allocation0]]
  $region58: #{run.1} parent=0
    _
  %s10 = ssub.s32 1, %s8
  %s11 = scalar_select 0, %s10, %s8
  $region1: #{run.1} parent=0
    #allocation2 [shape = 'u8[32768]{0}', space=vmem, size = 0x8000, scoped, tag = 'input window, operand 2, single buffered']
    #allocation3 [shape = 's32[1]{0}', space=sflag, size = 0x4, scoped, tag = 'scoped memory for run.1']
    #allocation4 [shape = 'u8[16384]{0}', space=vmem, size = 0x4000, scoped, tag = 'input window, operand 3, single buffered']
    #allocation5 [shape = 's32[1]{0}', space=sflag, size = 0x4, scoped, tag = 'scoped memory for run.1']
    #allocation6 [shape = 'u8[16384]{0}', space=vmem, size = 0x4000, scoped, tag = 'input window, operand 4, single buffered']
    #allocation7 [shape = 'u8[16384]{0}', space=vmem, size = 0x4000, scoped, tag = 'input window, operand 5, single buffered']
    #allocation8 [shape = 's32[1]{0}', space=sflag, size = 0x4, scoped, tag = 'scoped memory for run.1']
    #allocation9 [shape = 'u8[65536]{0}', space=vmem, size = 0x10000, scoped, tag = 'input window, operand 6, single buffered']
    %12 = vsyncpa [#allocation3], 0
    %13 = vsyncpa [#allocation5], 0
    %14 = vsyncpa [#allocation8], 0
    // Predicated region
    $region2: #{run.1} parent=1 // pred_check
      _
    $region3: #{run.1} parent=1 // pred_check_branch
      %16 = sbr.rel (0) target = $region5
    $region4: #{run.1} parent=1 // pred_region
      _
    $region5: #{run.1} parent=1 // pred_fallthru
      _
    // Predicated region
    $region6: #{run.1} parent=1 // pred_check
      _
    $region7: #{run.1} parent=1 // pred_check_branch
      %18 = sbr.rel (0) target = $region9
    $region8: #{run.1} parent=1 // pred_region
      _
    $region9: #{run.1} parent=1 // pred_fallthru
      _
    // Predicated region
    $region10: #{run.1} parent=1 // pred_check
      _
    $region11: #{run.1} parent=1 // pred_check_branch
      %20 = sbr.rel (0) target = $region13
    $region12: #{run.1} parent=1 // pred_region
      %s22 = ssub.s32 1024, 1024
      %23 = vsyncadd [#allocation3], %s22
      %s24 = sshll.u32 [#allocation2], 4
      %s25 = int_to_ptr.vmem [resolvable:$true] %s24
      %30 = dma.hbm_to_vmem [thread:$0]  %s2, 1024, %s25, [#allocation3], 128, 128, 8
    $region13: #{run.1} parent=1 // pred_fallthru
      _
    // Predicated region
    $region14: #{run.1} parent=1 // pred_check
      _
    $region15: #{run.1} parent=1 // pred_check_branch
      %32 = sbr.rel (0) target = $region17
    $region16: #{run.1} parent=1 // pred_region
      %s34 = ssub.s32 512, 512
      %35 = vsyncadd [#allocation5], %s34
      %s36 = sshll.u32 [#allocation4], 4
      %s37 = int_to_ptr.vmem [resolvable:$true] %s36
      %42 = dma.hbm_to_vmem [thread:$0]  %s3, 512, %s37, [#allocation5], 128, 128, 8
    $region17: #{run.1} parent=1 // pred_fallthru
      _
    // Predicated region
    $region18: #{run.1} parent=1 // pred_check
      _
    $region19: #{run.1} parent=1 // pred_check_branch
      %44 = sbr.rel (0) target = $region21
    $region20: #{run.1} parent=1 // pred_region
      %s46 = ssub.s32 512, 512
      %47 = vsyncadd [#allocation5], %s46
      %s48 = sshll.u32 [#allocation6], 4
      %s49 = int_to_ptr.vmem [resolvable:$true] %s48
      %54 = dma.hbm_to_vmem [thread:$0]  %s4, 512, %s49, [#allocation5], 128, 128, 8
    $region21: #{run.1} parent=1 // pred_fallthru
      _
    // Predicated region
    $region22: #{run.1} parent=1 // pred_check
      _
    $region23: #{run.1} parent=1 // pred_check_branch
      %56 = sbr.rel (0) target = $region25
    $region24: #{run.1} parent=1 // pred_region
      %s58 = ssub.s32 512, 512
      %59 = vsyncadd [#allocation8], %s58
      %s60 = sshll.u32 [#allocation7], 4
      %s61 = int_to_ptr.vmem [resolvable:$true] %s60
      %66 = dma.hbm_to_vmem [thread:$0]  %s5, 512, %s61, [#allocation8], 128, 128, 8
    $region25: #{run.1} parent=1 // pred_fallthru
      _
    // Predicated region
    $region26: #{run.1} parent=1 // pred_check
      _
    $region27: #{run.1} parent=1 // pred_check_branch
      %68 = sbr.rel (0) target = $region29
    $region28: #{run.1} parent=1 // pred_region
      %s70 = ssub.s32 2048, 2048
      %71 = vsyncadd [#allocation8], %s70
      %s72 = sshll.u32 [#allocation9], 4
      %s73 = int_to_ptr.vmem [resolvable:$true] %s72
      %78 = dma.hbm_to_vmem [thread:$0]  %s6, 2048, %s73, [#allocation8], 128, 128, 8
    $region29: #{run.1} parent=1 // pred_fallthru
      _
    // Predicated region
    $region30: #{run.1} parent=1 // pred_check
      _
    $region31: #{run.1} parent=1 // pred_check_branch
      %80 = sbr.rel (0) target = $region33
    $region32: #{run.1} parent=1 // pred_region
      %81 = dma.done [#allocation3], 1024
    $region33: #{run.1} parent=1 // pred_fallthru
      _
    // Predicated region
    $region34: #{run.1} parent=1 // pred_check
      _
    $region35: #{run.1} parent=1 // pred_check_branch
      %83 = sbr.rel (0) target = $region37
    $region36: #{run.1} parent=1 // pred_region
      %84 = dma.done [#allocation5], 512
    $region37: #{run.1} parent=1 // pred_fallthru
      _
    // Predicated region
    $region38: #{run.1} parent=1 // pred_check
      _
    $region39: #{run.1} parent=1 // pred_check_branch
      %86 = sbr.rel (0) target = $region41
    $region40: #{run.1} parent=1 // pred_region
      %87 = dma.done [#allocation5], 512
    $region41: #{run.1} parent=1 // pred_fallthru
      _
    // Predicated region
    $region42: #{run.1} parent=1 // pred_check
      _
    $region43: #{run.1} parent=1 // pred_check_branch
      %89 = sbr.rel (0) target = $region45
    $region44: #{run.1} parent=1 // pred_region
      %90 = dma.done [#allocation8], 512
    $region45: #{run.1} parent=1 // pred_fallthru
      _
    // Predicated region
    $region46: #{run.1} parent=1 // pred_check
      _
    $region47: #{run.1} parent=1 // pred_check_branch
      %92 = sbr.rel (0) target = $region49
    $region48: #{run.1} parent=1 // pred_region
      %93 = dma.done [#allocation8], 2048
    $region49: #{run.1} parent=1 // pred_fallthru
      _
    %v94 = vld [vmem:[%s0] sm:$0xff]
    %v95 = vld [vmem:[%s0 + $0x8] sm:$0xff]
    %v96 = vld [vmem:[%s1] sm:$0xff]
    %vm97 = vcmask 261120
    %v98 = vsel %vm97, %v94, 0.0
    %99 = vadd.xlane.f32.xlu0 %v98
    %v100 = vpop.xlane.xlu0 %99
    %v101 = vsel %vm97, %v95, 0.0
    %102 = vadd.xlane.f32.xlu0 %v101
    %v103 = vpop.xlane.xlu0 %102
    %v104 = vrcp.pop 32.0
    %v105 = vmul.f32 %v100, %v104
    %v106 = vmul.f32 %v103, %v104
    %v107 = vsub.f32 %v94, %v105
    %v108 = vsub.f32 %v95, %v106
    %v109 = vmul.f32 %v107, %v107
    %v110 = vmul.f32 %v108, %v108
    %v111 = vsel %vm97, %v109, 0.0
    %112 = vadd.xlane.f32.xlu0 %v111
    %v113 = vpop.xlane.xlu0 %112
    %v114 = vsel %vm97, %v110, 0.0
    %115 = vadd.xlane.f32.xlu0 %v114
    %v116 = vpop.xlane.xlu0 %115
    %v117 = vmul.f32 %v113, %v104
    %v118 = vmul.f32 %v116, %v104
    %v119 = vadd.f32 %v117, 1e-05
    %v120 = vadd.f32 %v118, 1e-05
    %v121 = vrsqrt.pop %v119
    %v122 = vrsqrt.pop %v120
    %v123 = vmul.f32 %v107, %v121
    %v124 = vmul.f32 %v108, %v122
    %v125 = vlaneseq
    %v126 = vshrl.u32 %v125, 7
    %v127 = vsub.s32 0, %v126
    %v128 = vrot.slane %v96, %v127
    %v129 = vmul.f32 %v123, %v128
    %v130 = vmul.f32 %v124, %v128
    %v131 = vlaneseq
    %v132 = vshrl.u32 %v131, 7
    %v133 = vsub.s32 1, %v132
    %v134 = vrot.slane %v96, %v133
    %v135 = vadd.f32 %v129, %v134
    %v136 = vadd.f32 %v130, %v134
    %v137 = vld [vmem:[#allocation4] sm:$0xff]
    %v138 = vld [vmem:[#allocation4 + $0x8] sm:$0xff]
    %v139 = vld [vmem:[#allocation4 + $0x10] sm:$0xff]
    %v140 = vld [vmem:[#allocation4 + $0x18] sm:$0xff]
    %v141 = vlaneseq
    %v142 = vshrl.u32 %v141, 7
    %v143 = vsub.s32 6, %v142
    %v144 = vrot.slane %v96, %v143
    %v146 = vsel %vm97, %v135, 0
    %v149 = vsel %vm97, %v136, 0
    %151 = vmatprep.subr.mxu0 0.0
    %152 = vmatpush1.msra.mxu0 0.0
    %153 = vmatprep.subr.mxu0 0.0
    %154 = vmatpush1.msra.mxu0 0.0
    %155 = vmatprep.subr.mxu0 0.0
    %156 = vmatpush1.msra.mxu0 0.0
    %157 = vmatprep.subr.mxu0 0.0
    %158 = vmatpush1.msra.mxu0 0.0
    %159 = vmatprep.subr.mxu0 0.0
    %160 = vmatpush1.msra.mxu0 0.0
    %161 = vmatprep.subr.mxu0 0.0
    %162 = vmatpush1.msra.mxu0 0.0
    %163 = vmatprep.subr.mxu0 0.0
    %164 = vmatpush1.msra.mxu0 0.0
    %165 = vmatprep.subr.mxu0 0.0
    %166 = vmatpush1.msra.mxu0 0.0
    %167 = vmatprep.subr.mxu0 0.0
    %168 = vmatpush1.msra.mxu0 0.0
    %169 = vmatprep.subr.mxu0 0.0
    %170 = vmatpush1.msra.mxu0 0.0
    %171 = vmatprep.subr.mxu0 0.0
    %172 = vmatpush1.msra.mxu0 0.0
    %173 = vmatprep.subr.mxu0 0.0
    %174 = vmatpush1.msra.mxu0 0.0
    %175 = vmatprep.subr.mxu0 0.0
    %176 = vmatpush1.msra.mxu0 %v140
    %177 = vmatprep.subr.mxu0 0.0
    %178 = vmatpush1.msra.mxu0 %v139
    %179 = vmatprep.subr.mxu0 0.0
    %180 = vmatpush1.msra.mxu0 %v138
    %181 = vmatprep.subr.mxu0 0.0
    %182 = vmatpush1.msra.mxu0 %v137
    %183 = vmatprep.subr.mxu0 0.0
    %184 = vmatpush2.msra.mxu0 0.0
    %185 = vmatprep.subr.mxu0 0.0
    %186 = vmatpush2.msra.mxu0 0.0
    %187 = vmatprep.subr.mxu0 0.0
    %188 = vmatpush2.msra.mxu0 0.0
    %189 = vmatprep.subr.mxu0 0.0
    %190 = vmatpush2.msra.mxu0 0.0
    %191 = vmatprep.subr.mxu0 0.0
    %192 = vmatpush2.msra.mxu0 0.0
    %193 = vmatprep.subr.mxu0 0.0
    %194 = vmatpush2.msra.mxu0 0.0
    %195 = vmatprep.subr.mxu0 0.0
    %196 = vmatpush2.msra.mxu0 0.0
    %197 = vmatprep.subr.mxu0 0.0
    %198 = vmatpush2.msra.mxu0 0.0
    %199 = vmatprep.subr.mxu0 0.0
    %200 = vmatpush2.msra.mxu0 0.0
    %201 = vmatprep.subr.mxu0 0.0
    %202 = vmatpush2.msra.mxu0 0.0
    %203 = vmatprep.subr.mxu0 0.0
    %204 = vmatpush2.msra.mxu0 0.0
    %205 = vmatprep.subr.mxu0 0.0
    %206 = vmatpush2.msra.mxu0 0.0
    %207 = vmatprep.subr.mxu0 0.0
    %208 = vmatpush2.msra.mxu0 0.0
    %209 = vmatprep.subr.mxu0 0.0
    %210 = vmatpush2.msra.mxu0 0.0
    %211 = vmatprep.subr.mxu0 0.0
    %212 = vmatpush2.msra.mxu0 0.0
    %213 = vmatprep.subr.mxu0 0.0
    %214 = vmatpush2.msra.mxu0 0.0
    %215 = vmatprep.mubr.f32.mxu0 0.0
    %216 = vmatmul.mubr.f32.gmra.mxu0 %v146
    %v217 = vpop.f32.mrf.mxu0
    %v218 = vadd.f32 %v144, %v217
    %v219 = vpop.f32.mrf.mxu0
    %220 = vmatprep.mubr.f32.mxu0 0.0
    %221 = vmatmul.mubr.f32.gmra.mxu0 %v149
    %v222 = vpop.f32.mrf.mxu0
    %v223 = vadd.f32 %v144, %v222
    %v224 = vpop.f32.mrf.mxu0
    %225 = vdwg.mxu0
    %228 = vrot.lane.b32.xlu0 %v218, 120
    %v229 = vpop.permute.xlu0 %228
    %230 = vrot.lane.b32.xlu0 %v223, 120
    %v231 = vpop.permute.xlu0 %230
    %232 = vrot.lane.b32.xlu0 %v218, 112
    %v233 = vpop.permute.xlu0 %232
    %234 = vrot.lane.b32.xlu0 %v223, 112
    %v235 = vpop.permute.xlu0 %234
    %236 = vrot.lane.b32.xlu0 %v218, 104
    %v237 = vpop.permute.xlu0 %236
    %238 = vrot.lane.b32.xlu0 %v223, 104
    %v239 = vpop.permute.xlu0 %238
    %240 = vrot.lane.b32.xlu0 %v218, 96
    %v241 = vpop.permute.xlu0 %240
    %242 = vrot.lane.b32.xlu0 %v223, 96
    %v243 = vpop.permute.xlu0 %242
    %246 = vxpose.xlu0.b32.start [1/16] %v241, 128
    %247 = vxpose.xlu0.b32.cont [2/16] %v243, 128
    %248 = vxpose.xlu0.b32.cont [3/16] 0.0, 128
    %249 = vxpose.xlu0.b32.cont [4/16] 0.0, 128
    %250 = vxpose.xlu0.b32.cont [5/16] 0.0, 128
    %251 = vxpose.xlu0.b32.cont [6/16] 0.0, 128
    %252 = vxpose.xlu0.b32.cont [7/16] 0.0, 128
    %253 = vxpose.xlu0.b32.cont [8/16] 0.0, 128
    %254 = vxpose.xlu0.b32.cont [9/16] 0.0, 128
    %255 = vxpose.xlu0.b32.cont [10/16] 0.0, 128
    %256 = vxpose.xlu0.b32.cont [11/16] 0.0, 128
    %257 = vxpose.xlu0.b32.cont [12/16] 0.0, 128
    %258 = vxpose.xlu0.b32.cont [13/16] 0.0, 128
    %259 = vxpose.xlu0.b32.cont [14/16] 0.0, 128
    %260 = vxpose.xlu0.b32.cont [15/16] 0.0, 128
    %261 = vxpose.xlu0.b32.end [16/16] 0.0, 128
    %v262 = vpop.trf.xlu0
    %v263 = vpop.trf.xlu0
    %v264 = vpop.trf.xlu0
    %v265 = vpop.trf.xlu0
    %v266 = vpop.trf.xlu0
    %v267 = vpop.trf.xlu0
    %v268 = vpop.trf.xlu0
    %v269 = vpop.trf.xlu0
    %v270 = vpop.trf.xlu0
    %v271 = vpop.trf.xlu0
    %v272 = vpop.trf.xlu0
    %v273 = vpop.trf.xlu0
    %v274 = vpop.trf.xlu0
    %v275 = vpop.trf.xlu0
    %v276 = vpop.trf.xlu0
    %v277 = vpop.trf.xlu0
    %278 = vrot.lane.b32.xlu0 %v218, 88
    %v279 = vpop.permute.xlu0 %278
    %280 = vrot.lane.b32.xlu0 %v223, 88
    %v281 = vpop.permute.xlu0 %280
    %284 = vxpose.xlu0.b32.start [1/16] %v279, 128
    %285 = vxpose.xlu0.b32.cont [2/16] %v281, 128
    %286 = vxpose.xlu0.b32.cont [3/16] 0.0, 128
    %287 = vxpose.xlu0.b32.cont [4/16] 0.0, 128
    %288 = vxpose.xlu0.b32.cont [5/16] 0.0, 128
    %289 = vxpose.xlu0.b32.cont [6/16] 0.0, 128
    %290 = vxpose.xlu0.b32.cont [7/16] 0.0, 128
    %291 = vxpose.xlu0.b32.cont [8/16] 0.0, 128
    %292 = vxpose.xlu0.b32.cont [9/16] 0.0, 128
    %293 = vxpose.xlu0.b32.cont [10/16] 0.0, 128
    %294 = vxpose.xlu0.b32.cont [11/16] 0.0, 128
    %295 = vxpose.xlu0.b32.cont [12/16] 0.0, 128
    %296 = vxpose.xlu0.b32.cont [13/16] 0.0, 128
    %297 = vxpose.xlu0.b32.cont [14/16] 0.0, 128
    %298 = vxpose.xlu0.b32.cont [15/16] 0.0, 128
    %299 = vxpose.xlu0.b32.end [16/16] 0.0, 128
    %v300 = vpop.trf.xlu0
    %v301 = vpop.trf.xlu0
    %v302 = vpop.trf.xlu0
    %v303 = vpop.trf.xlu0
    %v304 = vpop.trf.xlu0
    %v305 = vpop.trf.xlu0
    %v306 = vpop.trf.xlu0
    %v307 = vpop.trf.xlu0
    %v308 = vpop.trf.xlu0
    %v309 = vpop.trf.xlu0
    %v310 = vpop.trf.xlu0
    %v311 = vpop.trf.xlu0
    %v312 = vpop.trf.xlu0
    %v313 = vpop.trf.xlu0
    %v314 = vpop.trf.xlu0
    %v315 = vpop.trf.xlu0
    %316 = vrot.lane.b32.xlu0 %v218, 80
    %v317 = vpop.permute.xlu0 %316
    %318 = vrot.lane.b32.xlu0 %v223, 80
    %v319 = vpop.permute.xlu0 %318
    %322 = vxpose.xlu0.b32.start [1/16] %v317, 128
    %323 = vxpose.xlu0.b32.cont [2/16] %v319, 128
    %324 = vxpose.xlu0.b32.cont [3/16] 0.0, 128
    %325 = vxpose.xlu0.b32.cont [4/16] 0.0, 128
    %326 = vxpose.xlu0.b32.cont [5/16] 0.0, 128
    %327 = vxpose.xlu0.b32.cont [6/16] 0.0, 128
    %328 = vxpose.xlu0.b32.cont [7/16] 0.0, 128
    %329 = vxpose.xlu0.b32.cont [8/16] 0.0, 128
    %330 = vxpose.xlu0.b32.cont [9/16] 0.0, 128
    %331 = vxpose.xlu0.b32.cont [10/16] 0.0, 128
    %332 = vxpose.xlu0.b32.cont [11/16] 0.0, 128
    %333 = vxpose.xlu0.b32.cont [12/16] 0.0, 128
    %334 = vxpose.xlu0.b32.cont [13/16] 0.0, 128
    %335 = vxpose.xlu0.b32.cont [14/16] 0.0, 128
    %336 = vxpose.xlu0.b32.cont [15/16] 0.0, 128
    %337 = vxpose.xlu0.b32.end [16/16] 0.0, 128
    %v338 = vpop.trf.xlu0
    %v339 = vpop.trf.xlu0
    %v340 = vpop.trf.xlu0
    %v341 = vpop.trf.xlu0
    %v342 = vpop.trf.xlu0
    %v343 = vpop.trf.xlu0
    %v344 = vpop.trf.xlu0
    %v345 = vpop.trf.xlu0
    %v346 = vpop.trf.xlu0
    %v347 = vpop.trf.xlu0
    %v348 = vpop.trf.xlu0
    %v349 = vpop.trf.xlu0
    %v350 = vpop.trf.xlu0
    %v351 = vpop.trf.xlu0
    %v352 = vpop.trf.xlu0
    %v353 = vpop.trf.xlu0
    %354 = vrot.lane.b32.xlu0 %v218, 72
    %v355 = vpop.permute.xlu0 %354
    %356 = vrot.lane.b32.xlu0 %v223, 72
    %v357 = vpop.permute.xlu0 %356
    %360 = vxpose.xlu0.b32.start [1/16] %v355, 128
    %361 = vxpose.xlu0.b32.cont [2/16] %v357, 128
    %362 = vxpose.xlu0.b32.cont [3/16] 0.0, 128
    %363 = vxpose.xlu0.b32.cont [4/16] 0.0, 128
    %364 = vxpose.xlu0.b32.cont [5/16] 0.0, 128
    %365 = vxpose.xlu0.b32.cont [6/16] 0.0, 128
    %366 = vxpose.xlu0.b32.cont [7/16] 0.0, 128
    %367 = vxpose.xlu0.b32.cont [8/16] 0.0, 128
    %368 = vxpose.xlu0.b32.cont [9/16] 0.0, 128
    %369 = vxpose.xlu0.b32.cont [10/16] 0.0, 128
    %370 = vxpose.xlu0.b32.cont [11/16] 0.0, 128
    %371 = vxpose.xlu0.b32.cont [12/16] 0.0, 128
    %372 = vxpose.xlu0.b32.cont [13/16] 0.0, 128
    %373 = vxpose.xlu0.b32.cont [14/16] 0.0, 128
    %374 = vxpose.xlu0.b32.cont [15/16] 0.0, 128
    %375 = vxpose.xlu0.b32.end [16/16] 0.0, 128
    %v376 = vpop.trf.xlu0
    %v377 = vpop.trf.xlu0
    %v378 = vpop.trf.xlu0
    %v379 = vpop.trf.xlu0
    %v380 = vpop.trf.xlu0
    %v381 = vpop.trf.xlu0
    %v382 = vpop.trf.xlu0
    %v383 = vpop.trf.xlu0
    %v384 = vpop.trf.xlu0
    %v385 = vpop.trf.xlu0
    %v386 = vpop.trf.xlu0
    %v387 = vpop.trf.xlu0
    %v388 = vpop.trf.xlu0
    %v389 = vpop.trf.xlu0
    %v390 = vpop.trf.xlu0
    %v391 = vpop.trf.xlu0
    %393 = vrot.lane.b32.xlu0 %v300, 16
    %v394 = vpop.permute.xlu0 %393
    %397 = vrot.lane.b32.xlu0 %v338, 32
    %v398 = vpop.permute.xlu0 %397
    %401 = vrot.lane.b32.xlu0 %v376, 48
    %v402 = vpop.permute.xlu0 %401
    %vm404 = vcmask 130048
    %v405 = vsel %vm404, %v262, %v394
    %v406 = vsel %vm97, %v405, %v398
    %vm407 = vcmask 392192
    %v408 = vsel %vm407, %v406, %v402
    %v409 = vld [vmem:[#allocation2] sm:$0xff]
    %v410 = vld [vmem:[#allocation2 + $0x8] sm:$0xff]
    %v411 = vld [vmem:[#allocation2 + $0x10] sm:$0xff]
    %v412 = vld [vmem:[#allocation2 + $0x18] sm:$0xff]
    %v413 = vld [vmem:[#allocation2 + $0x20] sm:$0xff]
    %v414 = vld [vmem:[#allocation2 + $0x28] sm:$0xff]
    %v415 = vld [vmem:[#allocation2 + $0x30] sm:$0xff]
    %v416 = vld [vmem:[#allocation2 + $0x38] sm:$0xff]
    %vm417 = vcmask 64512
    %v418 = vsel %vm417, %v218, 0
    %v420 = vsel %vm417, %v223, 0
    %v422 = vsel %vm417, %v229, 0
    %v424 = vsel %vm417, %v231, 0
    %v426 = vsel %vm417, %v233, 0
    %v428 = vsel %vm417, %v235, 0
    %v430 = vsel %vm417, %v237, 0
    %v432 = vsel %vm417, %v239, 0
    %434 = vmatprep.subr.mxu0 0.0
    %435 = vmatpush1.msra.mxu0 0.0
    %436 = vmatprep.subr.mxu0 0.0
    %437 = vmatpush1.msra.mxu0 0.0
    %438 = vmatprep.subr.mxu0 0.0
    %439 = vmatpush1.msra.mxu0 0.0
    %440 = vmatprep.subr.mxu0 0.0
    %441 = vmatpush1.msra.mxu0 0.0
    %442 = vmatprep.subr.mxu0 0.0
    %443 = vmatpush1.msra.mxu0 0.0
    %444 = vmatprep.subr.mxu0 0.0
    %445 = vmatpush1.msra.mxu0 0.0
    %446 = vmatprep.subr.mxu0 0.0
    %447 = vmatpush1.msra.mxu0 0.0
    %448 = vmatprep.subr.mxu0 0.0
    %449 = vmatpush1.msra.mxu0 0.0
    %450 = vmatprep.subr.mxu0 0.0
    %451 = vmatpush1.msra.mxu0 0.0
    %452 = vmatprep.subr.mxu0 0.0
    %453 = vmatpush1.msra.mxu0 0.0
    %454 = vmatprep.subr.mxu0 0.0
    %455 = vmatpush1.msra.mxu0 0.0
    %456 = vmatprep.subr.mxu0 0.0
    %457 = vmatpush1.msra.mxu0 0.0
    %458 = vmatprep.subr.mxu0 0.0
    %459 = vmatpush1.msra.mxu0 0.0
    %460 = vmatprep.subr.mxu0 0.0
    %461 = vmatpush1.msra.mxu0 0.0
    %462 = vmatprep.subr.mxu0 0.0
    %463 = vmatpush1.msra.mxu0 0.0
    %464 = vmatprep.subr.mxu0 0.0
    %465 = vmatpush1.msra.mxu0 %v408
    %466 = vmatprep.subr.mxu0 0.0
    %467 = vmatpush2.msra.mxu0 0.0
    %468 = vmatprep.subr.mxu0 0.0
    %469 = vmatpush2.msra.mxu0 0.0
    %470 = vmatprep.subr.mxu0 0.0
    %471 = vmatpush2.msra.mxu0 0.0
    %472 = vmatprep.subr.mxu0 0.0
    %473 = vmatpush2.msra.mxu0 0.0
    %474 = vmatprep.subr.mxu0 0.0
    %475 = vmatpush2.msra.mxu0 0.0
    %476 = vmatprep.subr.mxu0 0.0
    %477 = vmatpush2.msra.mxu0 0.0
    %478 = vmatprep.subr.mxu0 0.0
    %479 = vmatpush2.msra.mxu0 0.0
    %480 = vmatprep.subr.mxu0 0.0
    %481 = vmatpush2.msra.mxu0 0.0
    %482 = vmatprep.subr.mxu0 0.0
    %483 = vmatpush2.msra.mxu0 0.0
    %484 = vmatprep.subr.mxu0 0.0
    %485 = vmatpush2.msra.mxu0 0.0
    %486 = vmatprep.subr.mxu0 0.0
    %487 = vmatpush2.msra.mxu0 0.0
    %488 = vmatprep.subr.mxu0 0.0
    %489 = vmatpush2.msra.mxu0 0.0
    %490 = vmatprep.subr.mxu0 0.0
    %491 = vmatpush2.msra.mxu0 0.0
    %492 = vmatprep.subr.mxu0 0.0
    %493 = vmatpush2.msra.mxu0 0.0
    %494 = vmatprep.subr.mxu0 0.0
    %495 = vmatpush2.msra.mxu0 0.0
    %496 = vmatprep.subr.mxu0 0.0
    %497 = vmatpush2.msra.mxu0 0.0
    %498 = vmatprep.mubr.f32.mxu0 0.0
    %499 = vmatmul.mubr.f32.gmra.mxu0 %v418
    %v500 = vpop.f32.mrf.mxu0
    %v501 = vadd.f32 %v409, %v500
    %v502 = vpop.f32.mrf.mxu0
    %503 = vmatprep.mubr.f32.mxu0 0.0
    %504 = vmatmul.mubr.f32.gmra.mxu0 %v420
    %v505 = vpop.f32.mrf.mxu0
    %v506 = vadd.f32 %v410, %v505
    %v507 = vpop.f32.mrf.mxu0
    %508 = vmatprep.mubr.f32.mxu0 0.0
    %509 = vmatmul.mubr.f32.gmra.mxu0 %v422
    %v510 = vpop.f32.mrf.mxu0
    %v511 = vadd.f32 %v411, %v510
    %v512 = vpop.f32.mrf.mxu0
    %513 = vmatprep.mubr.f32.mxu0 0.0
    %514 = vmatmul.mubr.f32.gmra.mxu0 %v424
    %v515 = vpop.f32.mrf.mxu0
    %v516 = vadd.f32 %v412, %v515
    %v517 = vpop.f32.mrf.mxu0
    %518 = vmatprep.mubr.f32.mxu0 0.0
    %519 = vmatmul.mubr.f32.gmra.mxu0 %v426
    %v520 = vpop.f32.mrf.mxu0
    %v521 = vadd.f32 %v413, %v520
    %v522 = vpop.f32.mrf.mxu0
    %523 = vmatprep.mubr.f32.mxu0 0.0
    %524 = vmatmul.mubr.f32.gmra.mxu0 %v428
    %v525 = vpop.f32.mrf.mxu0
    %v526 = vadd.f32 %v414, %v525
    %v527 = vpop.f32.mrf.mxu0
    %528 = vmatprep.mubr.f32.mxu0 0.0
    %529 = vmatmul.mubr.f32.gmra.mxu0 %v430
    %v530 = vpop.f32.mrf.mxu0
    %v531 = vadd.f32 %v415, %v530
    %v532 = vpop.f32.mrf.mxu0
    %533 = vmatprep.mubr.f32.mxu0 0.0
    %534 = vmatmul.mubr.f32.gmra.mxu0 %v432
    %v535 = vpop.f32.mrf.mxu0
    %v536 = vadd.f32 %v416, %v535
    %v537 = vpop.f32.mrf.mxu0
    %538 = vdwg.mxu0
    %vm539 = vcmask 523264
    %v540 = vsel %vm539, %v501, -inf
    %541 = vmax.xlane.f32.xlu0 %v540
    %v542 = vpop.xlane.xlu0 %541
    %v543 = vsel %vm539, %v506, -inf
    %544 = vmax.xlane.f32.xlu0 %v543
    %v545 = vpop.xlane.xlu0 %544
    %v546 = vsel %vm539, %v511, -inf
    %547 = vmax.xlane.f32.xlu0 %v546
    %v548 = vpop.xlane.xlu0 %547
    %v549 = vsel %vm539, %v516, -inf
    %550 = vmax.xlane.f32.xlu0 %v549
    %v551 = vpop.xlane.xlu0 %550
    %v552 = vsel %vm539, %v521, -inf
    %553 = vmax.xlane.f32.xlu0 %v552
    %v554 = vpop.xlane.xlu0 %553
    %v555 = vsel %vm539, %v526, -inf
    %556 = vmax.xlane.f32.xlu0 %v555
    %v557 = vpop.xlane.xlu0 %556
    %v558 = vsel %vm539, %v531, -inf
    %559 = vmax.xlane.f32.xlu0 %v558
    %v560 = vpop.xlane.xlu0 %559
    %v561 = vsel %vm539, %v536, -inf
    %562 = vmax.xlane.f32.xlu0 %v561
    %v563 = vpop.xlane.xlu0 %562
    %v564 = vsub.f32 %v501, %v542
    %v565 = vsub.f32 %v506, %v545
    %v566 = vsub.f32 %v511, %v548
    %v567 = vsub.f32 %v516, %v551
    %v568 = vsub.f32 %v521, %v554
    %v569 = vsub.f32 %v526, %v557
    %v570 = vsub.f32 %v531, %v560
    %v571 = vsub.f32 %v536, %v563
    %v572 = vmul.f32 %v564, 1.442695
    %v573 = vpow.pop %v572
    %v574 = vmul.f32 %v565, 1.442695
    %v575 = vpow.pop %v574
    %v576 = vmul.f32 %v566, 1.442695
    %v577 = vpow.pop %v576
    %v578 = vmul.f32 %v567, 1.442695
    %v579 = vpow.pop %v578
    %v580 = vmul.f32 %v568, 1.442695
    %v581 = vpow.pop %v580
    %v582 = vmul.f32 %v569, 1.442695
    %v583 = vpow.pop %v582
    %v584 = vmul.f32 %v570, 1.442695
    %v585 = vpow.pop %v584
    %v586 = vmul.f32 %v571, 1.442695
    %v587 = vpow.pop %v586
    %v588 = vsel %vm539, %v573, 0.0
    %589 = vadd.xlane.f32.xlu0 %v588
    %v590 = vpop.xlane.xlu0 %589
    %v591 = vsel %vm539, %v575, 0.0
    %592 = vadd.xlane.f32.xlu0 %v591
    %v593 = vpop.xlane.xlu0 %592
    %v594 = vsel %vm539, %v577, 0.0
    %595 = vadd.xlane.f32.xlu0 %v594
    %v596 = vpop.xlane.xlu0 %595
    %v597 = vsel %vm539, %v579, 0.0
    %598 = vadd.xlane.f32.xlu0 %v597
    %v599 = vpop.xlane.xlu0 %598
    %v600 = vsel %vm539, %v581, 0.0
    %601 = vadd.xlane.f32.xlu0 %v600
    %v602 = vpop.xlane.xlu0 %601
    %v603 = vsel %vm539, %v583, 0.0
    %604 = vadd.xlane.f32.xlu0 %v603
    %v605 = vpop.xlane.xlu0 %604
    %v606 = vsel %vm539, %v585, 0.0
    %607 = vadd.xlane.f32.xlu0 %v606
    %v608 = vpop.xlane.xlu0 %607
    %v609 = vsel %vm539, %v587, 0.0
    %610 = vadd.xlane.f32.xlu0 %v609
    %v611 = vpop.xlane.xlu0 %610
    %v612 = vrcp.pop %v590
    %v613 = vrcp.pop %v593
    %v614 = vrcp.pop %v596
    %v615 = vrcp.pop %v599
    %v616 = vrcp.pop %v602
    %v617 = vrcp.pop %v605
    %v618 = vrcp.pop %v608
    %v619 = vrcp.pop %v611
    %v620 = vmul.f32 %v573, %v612
    %v621 = vmul.f32 %v575, %v613
    %v622 = vmul.f32 %v577, %v614
    %v623 = vmul.f32 %v579, %v615
    %v624 = vmul.f32 %v581, %v616
    %v625 = vmul.f32 %v583, %v617
    %v626 = vmul.f32 %v585, %v618
    %v627 = vmul.f32 %v587, %v619
    %628 = vrot.lane.b32.xlu0 %v218, 64
    %v629 = vpop.permute.xlu0 %628
    %630 = vrot.lane.b32.xlu0 %v223, 64
    %v631 = vpop.permute.xlu0 %630
    %632 = vrot.lane.b32.xlu0 %v229, 64
    %v633 = vpop.permute.xlu0 %632
    %634 = vrot.lane.b32.xlu0 %v231, 64
    %v635 = vpop.permute.xlu0 %634
    %636 = vrot.lane.b32.xlu0 %v233, 64
    %v637 = vpop.permute.xlu0 %636
    %638 = vrot.lane.b32.xlu0 %v235, 64
    %v639 = vpop.permute.xlu0 %638
    %640 = vrot.lane.b32.xlu0 %v237, 64
    %v641 = vpop.permute.xlu0 %640
    %642 = vrot.lane.b32.xlu0 %v239, 64
    %v643 = vpop.permute.xlu0 %642
    %v653 = vsel %vm539, %v620, 0
    %v656 = vsel %vm539, %v621, 0
    %v659 = vsel %vm539, %v622, 0
    %v662 = vsel %vm539, %v623, 0
    %v665 = vsel %vm539, %v624, 0
    %v668 = vsel %vm539, %v625, 0
    %v671 = vsel %vm539, %v626, 0
    %v674 = vsel %vm539, %v627, 0
    %676 = vmatprep.subr.mxu0 0.0
    %677 = vmatpush1.msra.mxu0 0.0
    %678 = vmatprep.subr.mxu0 0.0
    %679 = vmatpush1.msra.mxu0 0.0
    %680 = vmatprep.subr.mxu0 0.0
    %681 = vmatpush1.msra.mxu0 0.0
    %682 = vmatprep.subr.mxu0 0.0
    %683 = vmatpush1.msra.mxu0 0.0
    %684 = vmatprep.subr.mxu0 0.0
    %685 = vmatpush1.msra.mxu0 0.0
    %686 = vmatprep.subr.mxu0 0.0
    %687 = vmatpush1.msra.mxu0 0.0
    %688 = vmatprep.subr.mxu0 0.0
    %689 = vmatpush1.msra.mxu0 0.0
    %690 = vmatprep.subr.mxu0 0.0
    %691 = vmatpush1.msra.mxu0 0.0
    %692 = vmatprep.subr.mxu0 0.0
    %693 = vmatpush1.msra.mxu0 %v643
    %694 = vmatprep.subr.mxu0 0.0
    %695 = vmatpush1.msra.mxu0 %v641
    %696 = vmatprep.subr.mxu0 0.0
    %697 = vmatpush1.msra.mxu0 %v639
    %698 = vmatprep.subr.mxu0 0.0
    %699 = vmatpush1.msra.mxu0 %v637
    %700 = vmatprep.subr.mxu0 0.0
    %701 = vmatpush1.msra.mxu0 %v635
    %702 = vmatprep.subr.mxu0 0.0
    %703 = vmatpush1.msra.mxu0 %v633
    %704 = vmatprep.subr.mxu0 0.0
    %705 = vmatpush1.msra.mxu0 %v631
    %706 = vmatprep.subr.mxu0 0.0
    %707 = vmatpush1.msra.mxu0 %v629
    %708 = vmatprep.subr.mxu0 0.0
    %709 = vmatpush2.msra.mxu0 0.0
    %710 = vmatprep.subr.mxu0 0.0
    %711 = vmatpush2.msra.mxu0 0.0
    %712 = vmatprep.subr.mxu0 0.0
    %713 = vmatpush2.msra.mxu0 0.0
    %714 = vmatprep.subr.mxu0 0.0
    %715 = vmatpush2.msra.mxu0 0.0
    %716 = vmatprep.subr.mxu0 0.0
    %717 = vmatpush2.msra.mxu0 0.0
    %718 = vmatprep.subr.mxu0 0.0
    %719 = vmatpush2.msra.mxu0 0.0
    %720 = vmatprep.subr.mxu0 0.0
    %721 = vmatpush2.msra.mxu0 0.0
    %722 = vmatprep.subr.mxu0 0.0
    %723 = vmatpush2.msra.mxu0 0.0
    %724 = vmatprep.subr.mxu0 0.0
    %725 = vmatpush2.msra.mxu0 0.0
    %726 = vmatprep.subr.mxu0 0.0
    %727 = vmatpush2.msra.mxu0 0.0
    %728 = vmatprep.subr.mxu0 0.0
    %729 = vmatpush2.msra.mxu0 0.0
    %730 = vmatprep.subr.mxu0 0.0
    %731 = vmatpush2.msra.mxu0 0.0
    %732 = vmatprep.subr.mxu0 0.0
    %733 = vmatpush2.msra.mxu0 0.0
    %734 = vmatprep.subr.mxu0 0.0
    %735 = vmatpush2.msra.mxu0 0.0
    %736 = vmatprep.subr.mxu0 0.0
    %737 = vmatpush2.msra.mxu0 0.0
    %738 = vmatprep.subr.mxu0 0.0
    %739 = vmatpush2.msra.mxu0 0.0
    %740 = vmatprep.mubr.f32.mxu0 0.0
    %741 = vmatmul.mubr.f32.gmra.mxu0 %v653
    %v742 = vpop.f32.mrf.mxu0
    %v743 = vadd.f32 0.0, %v742
    %v744 = vpop.f32.mrf.mxu0
    %745 = vmatprep.mubr.f32.mxu0 0.0
    %746 = vmatmul.mubr.f32.gmra.mxu0 %v656
    %v747 = vpop.f32.mrf.mxu0
    %v748 = vadd.f32 0.0, %v747
    %v749 = vpop.f32.mrf.mxu0
    %750 = vmatprep.mubr.f32.mxu0 0.0
    %751 = vmatmul.mubr.f32.gmra.mxu0 %v659
    %v752 = vpop.f32.mrf.mxu0
    %v753 = vadd.f32 0.0, %v752
    %v754 = vpop.f32.mrf.mxu0
    %755 = vmatprep.mubr.f32.mxu0 0.0
    %756 = vmatmul.mubr.f32.gmra.mxu0 %v662
    %v757 = vpop.f32.mrf.mxu0
    %v758 = vadd.f32 0.0, %v757
    %v759 = vpop.f32.mrf.mxu0
    %760 = vmatprep.mubr.f32.mxu0 0.0
    %761 = vmatmul.mubr.f32.gmra.mxu0 %v665
    %v762 = vpop.f32.mrf.mxu0
    %v763 = vadd.f32 0.0, %v762
    %v764 = vpop.f32.mrf.mxu0
    %765 = vmatprep.mubr.f32.mxu0 0.0
    %766 = vmatmul.mubr.f32.gmra.mxu0 %v668
    %v767 = vpop.f32.mrf.mxu0
    %v768 = vadd.f32 0.0, %v767
    %v769 = vpop.f32.mrf.mxu0
    %770 = vmatprep.mubr.f32.mxu0 0.0
    %771 = vmatmul.mubr.f32.gmra.mxu0 %v671
    %v772 = vpop.f32.mrf.mxu0
    %v773 = vadd.f32 0.0, %v772
    %v774 = vpop.f32.mrf.mxu0
    %775 = vmatprep.mubr.f32.mxu0 0.0
    %776 = vmatmul.mubr.f32.gmra.mxu0 %v674
    %v777 = vpop.f32.mrf.mxu0
    %v778 = vadd.f32 0.0, %v777
    %v779 = vpop.f32.mrf.mxu0
    %780 = vdwg.mxu0
    %783 = vrot.lane.b32.xlu0 %v753, 8
    %v784 = vpop.permute.xlu0 %783
    %785 = vrot.lane.b32.xlu0 %v758, 8
    %v786 = vpop.permute.xlu0 %785
    %791 = vrot.lane.b32.xlu0 %v763, 16
    %v792 = vpop.permute.xlu0 %791
    %793 = vrot.lane.b32.xlu0 %v768, 16
    %v794 = vpop.permute.xlu0 %793
    %799 = vrot.lane.b32.xlu0 %v773, 24
    %v800 = vpop.permute.xlu0 %799
    %801 = vrot.lane.b32.xlu0 %v778, 24
    %v802 = vpop.permute.xlu0 %801
    %v805 = vsel %vm417, %v743, %v784
    %v806 = vsel %vm417, %v748, %v786
    %v807 = vsel %vm404, %v805, %v792
    %v808 = vsel %vm404, %v806, %v794
    %vm809 = vcmask 195584
    %v810 = vsel %vm809, %v807, %v800
    %v811 = vsel %vm809, %v808, %v802
    %v812 = vld [vmem:[#allocation6] sm:$0xff]
    %v813 = vld [vmem:[#allocation6 + $0x8] sm:$0xff]
    %v814 = vld [vmem:[#allocation6 + $0x10] sm:$0xff]
    %v815 = vld [vmem:[#allocation6 + $0x18] sm:$0xff]
    %v816 = vlaneseq
    %v817 = vshrl.u32 %v816, 7
    %v818 = vsub.s32 4, %v817
    %v819 = vrot.slane %v96, %v818
    %v821 = vsel %vm97, %v810, 0
    %v824 = vsel %vm97, %v811, 0
    %826 = vmatprep.subr.mxu0 0.0
    %827 = vmatpush1.msra.mxu0 0.0
    %828 = vmatprep.subr.mxu0 0.0
    %829 = vmatpush1.msra.mxu0 0.0
    %830 = vmatprep.subr.mxu0 0.0
    %831 = vmatpush1.msra.mxu0 0.0
    %832 = vmatprep.subr.mxu0 0.0
    %833 = vmatpush1.msra.mxu0 0.0
    %834 = vmatprep.subr.mxu0 0.0
    %835 = vmatpush1.msra.mxu0 0.0
    %836 = vmatprep.subr.mxu0 0.0
    %837 = vmatpush1.msra.mxu0 0.0
    %838 = vmatprep.subr.mxu0 0.0
    %839 = vmatpush1.msra.mxu0 0.0
    %840 = vmatprep.subr.mxu0 0.0
    %841 = vmatpush1.msra.mxu0 0.0
    %842 = vmatprep.subr.mxu0 0.0
    %843 = vmatpush1.msra.mxu0 0.0
    %844 = vmatprep.subr.mxu0 0.0
    %845 = vmatpush1.msra.mxu0 0.0
    %846 = vmatprep.subr.mxu0 0.0
    %847 = vmatpush1.msra.mxu0 0.0
    %848 = vmatprep.subr.mxu0 0.0
    %849 = vmatpush1.msra.mxu0 0.0
    %850 = vmatprep.subr.mxu0 0.0
    %851 = vmatpush1.msra.mxu0 %v815
    %852 = vmatprep.subr.mxu0 0.0
    %853 = vmatpush1.msra.mxu0 %v814
    %854 = vmatprep.subr.mxu0 0.0
    %855 = vmatpush1.msra.mxu0 %v813
    %856 = vmatprep.subr.mxu0 0.0
    %857 = vmatpush1.msra.mxu0 %v812
    %858 = vmatprep.subr.mxu0 0.0
    %859 = vmatpush2.msra.mxu0 0.0
    %860 = vmatprep.subr.mxu0 0.0
    %861 = vmatpush2.msra.mxu0 0.0
    %862 = vmatprep.subr.mxu0 0.0
    %863 = vmatpush2.msra.mxu0 0.0
    %864 = vmatprep.subr.mxu0 0.0
    %865 = vmatpush2.msra.mxu0 0.0
    %866 = vmatprep.subr.mxu0 0.0
    %867 = vmatpush2.msra.mxu0 0.0
    %868 = vmatprep.subr.mxu0 0.0
    %869 = vmatpush2.msra.mxu0 0.0
    %870 = vmatprep.subr.mxu0 0.0
    %871 = vmatpush2.msra.mxu0 0.0
    %872 = vmatprep.subr.mxu0 0.0
    %873 = vmatpush2.msra.mxu0 0.0
    %874 = vmatprep.subr.mxu0 0.0
    %875 = vmatpush2.msra.mxu0 0.0
    %876 = vmatprep.subr.mxu0 0.0
    %877 = vmatpush2.msra.mxu0 0.0
    %878 = vmatprep.subr.mxu0 0.0
    %879 = vmatpush2.msra.mxu0 0.0
    %880 = vmatprep.subr.mxu0 0.0
    %881 = vmatpush2.msra.mxu0 0.0
    %882 = vmatprep.subr.mxu0 0.0
    %883 = vmatpush2.msra.mxu0 0.0
    %884 = vmatprep.subr.mxu0 0.0
    %885 = vmatpush2.msra.mxu0 0.0
    %886 = vmatprep.subr.mxu0 0.0
    %887 = vmatpush2.msra.mxu0 0.0
    %888 = vmatprep.subr.mxu0 0.0
    %889 = vmatpush2.msra.mxu0 0.0
    %890 = vmatprep.mubr.f32.mxu0 0.0
    %891 = vmatmul.mubr.f32.gmra.mxu0 %v821
    %v892 = vpop.f32.mrf.mxu0
    %v893 = vadd.f32 %v819, %v892
    %v894 = vpop.f32.mrf.mxu0
    %895 = vmatprep.mubr.f32.mxu0 0.0
    %896 = vmatmul.mubr.f32.gmra.mxu0 %v824
    %v897 = vpop.f32.mrf.mxu0
    %v898 = vadd.f32 %v819, %v897
    %v899 = vpop.f32.mrf.mxu0
    %900 = vdwg.mxu0
    %v901 = vadd.f32 %v94, %v893
    %v902 = vadd.f32 %v95, %v898
    %v903 = vsel %vm97, %v901, 0.0
    %904 = vadd.xlane.f32.xlu0 %v903
    %v905 = vpop.xlane.xlu0 %904
    %v906 = vsel %vm97, %v902, 0.0
    %907 = vadd.xlane.f32.xlu0 %v906
    %v908 = vpop.xlane.xlu0 %907
    %v909 = vmul.f32 %v905, %v104
    %v910 = vmul.f32 %v908, %v104
    %v911 = vsub.f32 %v901, %v909
    %v912 = vsub.f32 %v902, %v910
    %v913 = vmul.f32 %v911, %v911
    %v914 = vmul.f32 %v912, %v912
    %v915 = vsel %vm97, %v913, 0.0
    %916 = vadd.xlane.f32.xlu0 %v915
    %v917 = vpop.xlane.xlu0 %916
    %v918 = vsel %vm97, %v914, 0.0
    %919 = vadd.xlane.f32.xlu0 %v918
    %v920 = vpop.xlane.xlu0 %919
    %v921 = vmul.f32 %v917, %v104
    %v922 = vmul.f32 %v920, %v104
    %v923 = vadd.f32 %v921, 1e-05
    %v924 = vadd.f32 %v922, 1e-05
    %v925 = vrsqrt.pop %v923
    %v926 = vrsqrt.pop %v924
    %v927 = vmul.f32 %v911, %v925
    %v928 = vmul.f32 %v912, %v926
    %v929 = vlaneseq
    %v930 = vshrl.u32 %v929, 7
    %v931 = vsub.s32 2, %v930
    %v932 = vrot.slane %v96, %v931
    %v933 = vmul.f32 %v927, %v932
    %v934 = vmul.f32 %v928, %v932
    %v935 = vlaneseq
    %v936 = vshrl.u32 %v935, 7
    %v937 = vsub.s32 3, %v936
    %v938 = vrot.slane %v96, %v937
    %v939 = vadd.f32 %v933, %v938
    %v940 = vadd.f32 %v934, %v938
    %v941 = vld [vmem:[#allocation7] sm:$0xff]
    %v942 = vld [vmem:[#allocation7 + $0x8] sm:$0xff]
    %v943 = vld [vmem:[#allocation7 + $0x10] sm:$0xff]
    %v944 = vld [vmem:[#allocation7 + $0x18] sm:$0xff]
    %v945 = vlaneseq
    %v946 = vshrl.u32 %v945, 7
    %v947 = vsub.s32 7, %v946
    %v948 = vrot.slane %v96, %v947
    %v950 = vsel %vm97, %v939, 0
    %v953 = vsel %vm97, %v940, 0
    %955 = vmatprep.subr.mxu0 0.0
    %956 = vmatpush1.msra.mxu0 0.0
    %957 = vmatprep.subr.mxu0 0.0
    %958 = vmatpush1.msra.mxu0 0.0
    %959 = vmatprep.subr.mxu0 0.0
    %960 = vmatpush1.msra.mxu0 0.0
    %961 = vmatprep.subr.mxu0 0.0
    %962 = vmatpush1.msra.mxu0 0.0
    %963 = vmatprep.subr.mxu0 0.0
    %964 = vmatpush1.msra.mxu0 0.0
    %965 = vmatprep.subr.mxu0 0.0
    %966 = vmatpush1.msra.mxu0 0.0
    %967 = vmatprep.subr.mxu0 0.0
    %968 = vmatpush1.msra.mxu0 0.0
    %969 = vmatprep.subr.mxu0 0.0
    %970 = vmatpush1.msra.mxu0 0.0
    %971 = vmatprep.subr.mxu0 0.0
    %972 = vmatpush1.msra.mxu0 0.0
    %973 = vmatprep.subr.mxu0 0.0
    %974 = vmatpush1.msra.mxu0 0.0
    %975 = vmatprep.subr.mxu0 0.0
    %976 = vmatpush1.msra.mxu0 0.0
    %977 = vmatprep.subr.mxu0 0.0
    %978 = vmatpush1.msra.mxu0 0.0
    %979 = vmatprep.subr.mxu0 0.0
    %980 = vmatpush1.msra.mxu0 %v944
    %981 = vmatprep.subr.mxu0 0.0
    %982 = vmatpush1.msra.mxu0 %v943
    %983 = vmatprep.subr.mxu0 0.0
    %984 = vmatpush1.msra.mxu0 %v942
    %985 = vmatprep.subr.mxu0 0.0
    %986 = vmatpush1.msra.mxu0 %v941
    %987 = vmatprep.subr.mxu0 0.0
    %988 = vmatpush2.msra.mxu0 0.0
    %989 = vmatprep.subr.mxu0 0.0
    %990 = vmatpush2.msra.mxu0 0.0
    %991 = vmatprep.subr.mxu0 0.0
    %992 = vmatpush2.msra.mxu0 0.0
    %993 = vmatprep.subr.mxu0 0.0
    %994 = vmatpush2.msra.mxu0 0.0
    %995 = vmatprep.subr.mxu0 0.0
    %996 = vmatpush2.msra.mxu0 0.0
    %997 = vmatprep.subr.mxu0 0.0
    %998 = vmatpush2.msra.mxu0 0.0
    %999 = vmatprep.subr.mxu0 0.0
    %1000 = vmatpush2.msra.mxu0 0.0
    %1001 = vmatprep.subr.mxu0 0.0
    %1002 = vmatpush2.msra.mxu0 0.0
    %1003 = vmatprep.subr.mxu0 0.0
    %1004 = vmatpush2.msra.mxu0 0.0
    %1005 = vmatprep.subr.mxu0 0.0
    %1006 = vmatpush2.msra.mxu0 0.0
    %1007 = vmatprep.subr.mxu0 0.0
    %1008 = vmatpush2.msra.mxu0 0.0
    %1009 = vmatprep.subr.mxu0 0.0
    %1010 = vmatpush2.msra.mxu0 0.0
    %1011 = vmatprep.subr.mxu0 0.0
    %1012 = vmatpush2.msra.mxu0 0.0
    %1013 = vmatprep.subr.mxu0 0.0
    %1014 = vmatpush2.msra.mxu0 0.0
    %1015 = vmatprep.subr.mxu0 0.0
    %1016 = vmatpush2.msra.mxu0 0.0
    %1017 = vmatprep.subr.mxu0 0.0
    %1018 = vmatpush2.msra.mxu0 0.0
    %1019 = vmatprep.mubr.f32.mxu0 0.0
    %1020 = vmatmul.mubr.f32.gmra.mxu0 %v950
    %v1021 = vpop.f32.mrf.mxu0
    %v1022 = vadd.f32 %v948, %v1021
    %v1023 = vpop.f32.mrf.mxu0
    %1024 = vmatprep.mubr.f32.mxu0 0.0
    %1025 = vmatmul.mubr.f32.gmra.mxu0 %v953
    %v1026 = vpop.f32.mrf.mxu0
    %v1027 = vadd.f32 %v948, %v1026
    %v1028 = vpop.f32.mrf.mxu0
    %1029 = vdwg.mxu0
    %v1030 = vmul.f32 %v1022, 0.5
    %v1031 = vmul.f32 %v1027, 0.5
    %v1032 = vrcp.pop 1.4142135
    %v1033 = vmul.f32 %v1022, %v1032
    %v1034 = vmul.f32 %v1027, %v1032
    %v1035 = verf.f32.pop %v1033
    %v1036 = verf.f32.pop %v1034
    %v1037 = vadd.f32 %v1035, 1.0
    %v1038 = vadd.f32 %v1036, 1.0
    %v1039 = vmul.f32 %v1030, %v1037
    %v1040 = vmul.f32 %v1031, %v1038
    %v1041 = vld [vmem:[#allocation9] sm:$0xff]
    %v1042 = vld [vmem:[#allocation9 + $0x8] sm:$0xff]
    %v1043 = vld [vmem:[#allocation9 + $0x10] sm:$0xff]
    %v1044 = vld [vmem:[#allocation9 + $0x18] sm:$0xff]
    %v1045 = vld [vmem:[#allocation9 + $0x20] sm:$0xff]
    %v1046 = vld [vmem:[#allocation9 + $0x28] sm:$0xff]
    %v1047 = vld [vmem:[#allocation9 + $0x30] sm:$0xff]
    %v1048 = vld [vmem:[#allocation9 + $0x38] sm:$0xff]
    %v1049 = vld [vmem:[#allocation9 + $0x40] sm:$0xff]
    %v1050 = vld [vmem:[#allocation9 + $0x48] sm:$0xff]
    %v1051 = vld [vmem:[#allocation9 + $0x50] sm:$0xff]
    %v1052 = vld [vmem:[#allocation9 + $0x58] sm:$0xff]
    %v1053 = vld [vmem:[#allocation9 + $0x60] sm:$0xff]
    %v1054 = vld [vmem:[#allocation9 + $0x68] sm:$0xff]
    %v1055 = vld [vmem:[#allocation9 + $0x70] sm:$0xff]
    %v1056 = vld [vmem:[#allocation9 + $0x78] sm:$0xff]
    %v1057 = vlaneseq
    %v1058 = vshrl.u32 %v1057, 7
    %v1059 = vsub.s32 5, %v1058
    %v1060 = vrot.slane %v96, %v1059
    %1061 = vmatprep.subr.mxu0 0.0
    %1062 = vmatpush1.msra.mxu0 %v1056
    %1063 = vmatprep.subr.mxu0 0.0
    %1064 = vmatpush1.msra.mxu0 %v1055
    %1065 = vmatprep.subr.mxu0 0.0
    %1066 = vmatpush1.msra.mxu0 %v1054
    %1067 = vmatprep.subr.mxu0 0.0
    %1068 = vmatpush1.msra.mxu0 %v1053
    %1069 = vmatprep.subr.mxu0 0.0
    %1070 = vmatpush1.msra.mxu0 %v1052
    %1071 = vmatprep.subr.mxu0 0.0
    %1072 = vmatpush1.msra.mxu0 %v1051
    %1073 = vmatprep.subr.mxu0 0.0
    %1074 = vmatpush1.msra.mxu0 %v1050
    %1075 = vmatprep.subr.mxu0 0.0
    %1076 = vmatpush1.msra.mxu0 %v1049
    %1077 = vmatprep.subr.mxu0 0.0
    %1078 = vmatpush1.msra.mxu0 %v1048
    %1079 = vmatprep.subr.mxu0 0.0
    %1080 = vmatpush1.msra.mxu0 %v1047
    %1081 = vmatprep.subr.mxu0 0.0
    %1082 = vmatpush1.msra.mxu0 %v1046
    %1083 = vmatprep.subr.mxu0 0.0
    %1084 = vmatpush1.msra.mxu0 %v1045
    %1085 = vmatprep.subr.mxu0 0.0
    %1086 = vmatpush1.msra.mxu0 %v1044
    %1087 = vmatprep.subr.mxu0 0.0
    %1088 = vmatpush1.msra.mxu0 %v1043
    %1089 = vmatprep.subr.mxu0 0.0
    %1090 = vmatpush1.msra.mxu0 %v1042
    %1091 = vmatprep.subr.mxu0 0.0
    %1092 = vmatpush1.msra.mxu0 %v1041
    %1093 = vmatprep.subr.mxu0 0.0
    %1094 = vmatpush2.msra.mxu0 0.0
    %1095 = vmatprep.subr.mxu0 0.0
    %1096 = vmatpush2.msra.mxu0 0.0
    %1097 = vmatprep.subr.mxu0 0.0
    %1098 = vmatpush2.msra.mxu0 0.0
    %1099 = vmatprep.subr.mxu0 0.0
    %1100 = vmatpush2.msra.mxu0 0.0
    %1101 = vmatprep.subr.mxu0 0.0
    %1102 = vmatpush2.msra.mxu0 0.0
    %1103 = vmatprep.subr.mxu0 0.0
    %1104 = vmatpush2.msra.mxu0 0.0
    %1105 = vmatprep.subr.mxu0 0.0
    %1106 = vmatpush2.msra.mxu0 0.0
    %1107 = vmatprep.subr.mxu0 0.0
    %1108 = vmatpush2.msra.mxu0 0.0
    %1109 = vmatprep.subr.mxu0 0.0
    %1110 = vmatpush2.msra.mxu0 0.0
    %1111 = vmatprep.subr.mxu0 0.0
    %1112 = vmatpush2.msra.mxu0 0.0
    %1113 = vmatprep.subr.mxu0 0.0
    %1114 = vmatpush2.msra.mxu0 0.0
    %1115 = vmatprep.subr.mxu0 0.0
    %1116 = vmatpush2.msra.mxu0 0.0
    %1117 = vmatprep.subr.mxu0 0.0
    %1118 = vmatpush2.msra.mxu0 0.0
    %1119 = vmatprep.subr.mxu0 0.0
    %1120 = vmatpush2.msra.mxu0 0.0
    %1121 = vmatprep.subr.mxu0 0.0
    %1122 = vmatpush2.msra.mxu0 0.0
    %1123 = vmatprep.subr.mxu0 0.0
    %1124 = vmatpush2.msra.mxu0 0.0
    %1125 = vmatprep.mubr.f32.mxu0 0.0
    %1126 = vmatmul.mubr.f32.gmra.mxu0 %v1039
    %v1127 = vpop.f32.mrf.mxu0
    %v1128 = vadd.f32 %v1060, %v1127
    %v1129 = vpop.f32.mrf.mxu0
    %1130 = vmatprep.mubr.f32.mxu0 0.0
    %1131 = vmatmul.mubr.f32.gmra.mxu0 %v1040
    %v1132 = vpop.f32.mrf.mxu0
    %v1133 = vadd.f32 %v1060, %v1132
    %v1134 = vpop.f32.mrf.mxu0
    %1135 = vdwg.mxu0
    %v1136 = vadd.f32 %v901, %v1128
    %v1137 = vadd.f32 %v902, %v1133
    %1138 = vst.msk [vmem:[%s7] sm:$0xff] %vm97, %v1136
    %1139 = vst.msk [vmem:[%s7 + $0x8] sm:$0xff] %vm97, %v1137
    // Predicated region
    $region50: #{run.1} parent=1 // pred_check
      _
    $region51: #{run.1} parent=1 // pred_check_branch
      %1141 = sbr.rel (0) target = $region53
    $region52: #{run.1} parent=1 // pred_region
      _
    $region53: #{run.1} parent=1 // pred_fallthru
      _
    // Predicated region
    $region54: #{run.1} parent=1 // pred_check
      _
    $region55: #{run.1} parent=1 // pred_check_branch
      %1143 = sbr.rel (0) target = $region57
    $region56: #{run.1} parent=1 // pred_region
      _
    $region57: #{run.1} parent=1 // pred_fallthru
      _
    %1144 = vsyncpa [#allocation3], 1
    %1145 = vsyncpa [#allocation5], 1
    %1146 = vsyncpa [#allocation8], 1

</llo_original>
